<compile_context>
chip_gen: v5e
topology: v5e:2x2
jax: 0.10.0
libtpu: 0.0.40
codegen_flags: <defaults>
</compile_context>

<pallas_src>
import jax
import jax.numpy as jnp
from jax.experimental import pallas as pl
from jax.experimental.pallas import tpu as pltpu


def _round_up(x, m):
    return ((x + m - 1) // m) * m


# --------------------------------------------------------------------------- #
# Kernel
# --------------------------------------------------------------------------- #
def _disc_kernel(hgen_ref, hprev_ref,
                 wphi_ref, wconv_ref, bconv_ref,
                 wout_ref, bout_ref,
                 o_ref):
    H = hgen_ref.shape[-1]

    # mlp_phi matmul (bias folded into the conv bias on the host): bf16 MXU
    # operands, f32 accumulation. astype is a no-op if inputs already arrive bf16.
    phi = jnp.dot(hgen_ref[...].astype(jnp.bfloat16), wphi_ref[...],
                  preferred_element_type=jnp.float32)
    phi_bf = phi.astype(jnp.bfloat16)
    hprev_bf = hprev_ref[...].astype(jnp.bfloat16)

    if H >= 256:
        # Two dots accumulating into one f32 result: avoids materializing a
        # (TB, 2H) bf16 concat in VMEM (static row slices of the weight ref are
        # free views; H is a multiple of 8 here).
        c = (jnp.dot(phi_bf, wconv_ref[:H, :], preferred_element_type=jnp.float32)
             + jnp.dot(hprev_bf, wconv_ref[H:, :], preferred_element_type=jnp.float32)
             + bconv_ref[...])
    else:
        # Small H (demo size): keep one K=2H matmul so the MXU depth stays full.
        x = jnp.concatenate([phi_bf, hprev_bf], axis=-1)
        c = (jnp.dot(x, wconv_ref[...], preferred_element_type=jnp.float32)
             + bconv_ref[...])

    # MaxPool1d(2): lanes [0:C] hold conv tap t=0, lanes [C:2C] hold tap t=1.
    # (C a multiple of 128 keeps this a pure VPU maximum, no cross-lane relayout.)
    C = c.shape[-1] // 2
    pooled = jnp.maximum(c[:, :C], c[:, C:])                       # f32, VPU

    # mlp_sigmoid Linear(C, 1): VPU multiply + cross-lane reduce (no N=1 MXU pass).
    logits = jnp.sum(pooled * wout_ref[...], axis=-1, keepdims=True) + bout_ref[...]

    # Lane-dense store: transpose the (TB, 1) column to a (1, TB) row so the
    # writeback is an unmasked contiguous vst instead of masked partial stores.
    o_ref[...] = jax.nn.sigmoid(logits).T


# --------------------------------------------------------------------------- #
# Wrapper
# --------------------------------------------------------------------------- #
def _choose_tile(B, block_b):
    """Batch tile: multiple of 8; >=2 grid steps when B is large enough (v7x 2 TCs)."""
    block_b = _round_up(max(block_b, 8), 8)
    tb_full = _round_up(B, 8)
    if tb_full <= block_b:
        if B >= 256:
            # Split the single block in two (rounded to a lane-friendly multiple
            # of 128) so the "parallel" axis can shard across both v7x cores.
            return _round_up(pl.cdiv(B, 2), 128)
        return tb_full
    return block_b


def threads_gan_discriminator(H_next_generated, H_next_real, H_prev, kparams,
                              *, block_b=512):
    """H_next_real is accepted for signature fidelity but unused (as in PyTorch)."""
    del H_next_real
    B, H = H_next_generated.shape
    two_c = kparams["w_conv"].shape[1]

    TB = _choose_tile(B, block_b)
    G = pl.cdiv(B, TB)          # ragged last block: no host-side jnp.pad copies

    act_spec = pl.BlockSpec((TB, H), lambda i: (i, 0))
    out_spec = pl.BlockSpec((1, TB), lambda i: (i, 0))

    # Weights: full-array blocks, constant index_map -> VMEM-resident. Single
    # buffer (no double-buffering needed since the block never changes).
    fixed_kwargs = {}
    if hasattr(pl, "Buffered"):
        fixed_kwargs["pipeline_mode"] = pl.Buffered(1)

    def fixed(arr):
        return pl.BlockSpec(arr.shape, lambda i: (0,) * arr.ndim, **fixed_kwargs)

    act_bytes = (H_next_generated.size * H_next_generated.dtype.itemsize
                 + H_prev.size * H_prev.dtype.itemsize)
    w_bytes = sum(int(v.size) * v.dtype.itemsize for v in kparams.values())
    cost = pl.CostEstimate(
        flops=int(2 * G * TB * (H * H + 2 * H * two_c) + 3 * G * TB * two_c),
        transcendentals=int(G * TB),
        bytes_accessed=int(act_bytes + w_bytes + G * TB * 4),
    )

    out = pl.pallas_call(
        _disc_kernel,
        out_shape=jax.ShapeDtypeStruct((G, TB), jnp.float32),
        grid=(G,),
        in_specs=[act_spec, act_spec,
                  fixed(kparams["w_phi"]),
                  fixed(kparams["w_conv"]),
                  fixed(kparams["b_conv"]),
                  fixed(kparams["w_out"]),
                  fixed(kparams["b_out"])],
        out_specs=out_spec,
        compiler_params=pltpu.CompilerParams(
            dimension_semantics=("parallel",),
            vmem_limit_bytes=48 * 1024 * 1024),
        cost_estimate=cost,
    )(H_next_generated, H_prev,
      kparams["w_phi"], kparams["w_conv"], kparams["b_conv"],
      kparams["w_out"], kparams["b_out"])

    return out.reshape(-1)[:B].reshape(B, 1)


# --------------------------------------------------------------------------- #
# Parameters: raw PyTorch-orientation params + host-side packing
# --------------------------------------------------------------------------- #
def init_raw_params(key, hidden_size, cnn_channels, kernel_size=3):
    """Parameters in native PyTorch layouts (Linear: (out,in); Conv1d: (out,in,k))."""
    ks = jax.random.split(key, 6)
    scale = 0.02
    return {
        "phi_w": scale * jax.random.normal(ks[0], (hidden_size, hidden_size), jnp.float32),
        "phi_b": scale * jax.random.normal(ks[1], (hidden_size,), jnp.float32),
        "conv_w": scale * jax.random.normal(ks[2], (cnn_channels, hidden_size, kernel_size), jnp.float32),
        "conv_b": scale * jax.random.normal(ks[3], (cnn_channels,), jnp.float32),
        "out_w": scale * jax.random.normal(ks[4], (1, cnn_channels), jnp.float32),
        "out_b": scale * jax.random.normal(ks[5], (1,), jnp.float32),
    }
    # TODO(synk): BatchNorm1d(num_features) exists in the module but is never used
    # in forward(), so no parameters are created for it.


def pack_params(raw):
    """Host-side packing: block conv weight, phi bias folded into conv bias (exact, f32),
    bf16 matmul weights. Keeping cnn_channels a multiple of 128 keeps the in-kernel
    maxpool split on a lane-tile boundary."""
    w_phi = raw["phi_w"].T                        # (H, H)  so activations do x @ W
    w_c0 = raw["conv_w"][:, :, 0].T               # each conv tap pre-transposed to (H, C)
    w_c1 = raw["conv_w"][:, :, 1].T
    w_c2 = raw["conv_w"][:, :, 2].T
    # Block weight: [phi | hprev] @ W_conv -> [c_t0 | c_t1]
    #   c_t0 = phi @ W1 + hprev @ W2 ;  c_t1 = phi @ W0 + hprev @ W1
    w_conv = jnp.concatenate(
        [jnp.concatenate([w_c1, w_c0], axis=1),
         jnp.concatenate([w_c2, w_c1], axis=1)], axis=0)            # (2H, 2C)
    # Fold the phi bias into the conv bias:  (phi0 + b_phi) @ Wk = phi0 @ Wk + b_phi @ Wk
    b_phi, b_c = raw["phi_b"], raw["conv_b"]
    b_conv = jnp.concatenate([b_phi @ w_c1 + b_c, b_phi @ w_c0 + b_c])[None, :]  # (1, 2C)
    return {
        "w_phi": w_phi.astype(jnp.bfloat16),
        "w_conv": w_conv.astype(jnp.bfloat16),
        "b_conv": b_conv.astype(jnp.float32),
        "w_out": raw["out_w"].astype(jnp.float32),               # (1, C) row for VPU reduce
        "b_out": raw["out_b"][None, :].astype(jnp.float32),      # (1, 1)
    }


# --------------------------------------------------------------------------- #
# Independent reference (mirrors the PyTorch ops exactly, f32, no packing)
# --------------------------------------------------------------------------- #
def reference_forward(H_gen, H_prev, raw):
    phi = H_gen @ raw["phi_w"].T + raw["phi_b"]                  # Linear
    x = jnp.stack([phi, H_prev], axis=2)                         # (B, H, 2)
    x_pad = jnp.pad(x, ((0, 0), (0, 0), (1, 1)))                 # Conv1d padding=1
    c = jnp.stack(
        [jnp.einsum("oik,bik->bo", raw["conv_w"], x_pad[:, :, t:t + 3]) for t in range(2)],
        axis=2) + raw["conv_b"][None, :, None]                   # (B, C, 2)
    pooled = jnp.max(c, axis=2)                                  # MaxPool1d(2).squeeze(2)
    return jax.nn.sigmoid(pooled @ raw["out_w"].T + raw["out_b"])


if __name__ == "__main__":
    hidden_size = 128     # scaled-down from 768
    cnn_channels = 128
    batch = 8

    key = jax.random.PRNGKey(0)
    k_gen, k_real, k_prev, k_param = jax.random.split(key, 4)

    H_next_generated = jax.random.normal(k_gen, (batch, hidden_size), jnp.float32)
    H_next_real = jax.random.normal(k_real, (batch, hidden_size), jnp.float32)  # unused in forward
    H_prev = jax.random.normal(k_prev, (batch, hidden_size), jnp.float32)

    raw = init_raw_params(k_param, hidden_size, cnn_channels)
    kparams = pack_params(raw)

    out = threads_gan_discriminator(H_next_generated, H_next_real, H_prev, kparams)
    out = jax.block_until_ready(out)

    ref = reference_forward(H_next_generated, H_prev, raw)
    assert out.shape == (batch, 1)
    assert jnp.allclose(out, ref, atol=2e-2), "kernel output mismatch vs reference"

    print("KERNEL_OK")
</pallas_src>

<mosaic_0001>
module attributes {stable_mosaic.version = 11 : i64} {
  func.func @_disc_kernel(%arg0: i32, %arg1: memref<8x128xf32, #tpu.memory_space<vmem>>, %arg2: memref<8x128xf32, #tpu.memory_space<vmem>>, %arg3: memref<128x128xbf16, #tpu.memory_space<vmem>>, %arg4: memref<256x256xbf16, #tpu.memory_space<vmem>>, %arg5: memref<1x256xf32, #tpu.memory_space<vmem>>, %arg6: memref<1x128xf32, #tpu.memory_space<vmem>>, %arg7: memref<1x1xf32, #tpu.memory_space<vmem>>, %arg8: memref<1x8xf32, #tpu.memory_space<vmem>>) attributes {dimension_semantics = [#tpu.dimension_semantics<parallel>], iteration_bounds = array<i64: 1>, scalar_prefetch = 0 : i64, scratch_operands = 0 : i64, tpu.core_type = #tpu.core_type<tc>, window_params = [{transform_indices = @transform_0, window_bounds = array<i64: 8, 128>}, {transform_indices = @transform_1, window_bounds = array<i64: 8, 128>}, {pipeline_mode = #tpu.pipeline_mode<synchronous>, transform_indices = @transform_2, window_bounds = array<i64: 128, 128>}, {pipeline_mode = #tpu.pipeline_mode<synchronous>, transform_indices = @transform_3, window_bounds = array<i64: 256, 256>}, {pipeline_mode = #tpu.pipeline_mode<synchronous>, transform_indices = @transform_4, window_bounds = array<i64: 1, 256>}, {pipeline_mode = #tpu.pipeline_mode<synchronous>, transform_indices = @transform_5, window_bounds = array<i64: 1, 128>}, {pipeline_mode = #tpu.pipeline_mode<synchronous>, transform_indices = @transform_6, window_bounds = array<i64: 1, 1>}, {transform_indices = @transform_7, window_bounds = array<i64: 1, 8>}]} {
    %c0 = arith.constant 0 : index
    %c0_0 = arith.constant 0 : index
    %0 = vector.load %arg1[%c0, %c0_0] : memref<8x128xf32, #tpu.memory_space<vmem>>, vector<8x128xf32>
    %1 = arith.truncf %0 : vector<8x128xf32> to vector<8x128xbf16>
    %c0_1 = arith.constant 0 : index
    %c0_2 = arith.constant 0 : index
    %2 = vector.load %arg3[%c0_1, %c0_2] : memref<128x128xbf16, #tpu.memory_space<vmem>>, vector<128x128xbf16>
    %cst = arith.constant dense<0.000000e+00> : vector<8x128xf32>
    %3 = tpu.matmul %1, %2, %cst {dimension_numbers = #tpu.dot_dimension_numbers<[1], [0], [0], [1], [0, 0, 1, 1], [], []>} : vector<8x128xbf16>, vector<128x128xbf16>, vector<8x128xf32> -> vector<8x128xf32>
    %4 = arith.truncf %3 : vector<8x128xf32> to vector<8x128xbf16>
    %c0_3 = arith.constant 0 : index
    %c0_4 = arith.constant 0 : index
    %5 = vector.load %arg2[%c0_3, %c0_4] : memref<8x128xf32, #tpu.memory_space<vmem>>, vector<8x128xf32>
    %6 = arith.truncf %5 : vector<8x128xf32> to vector<8x128xbf16>
    %7 = tpu.concatenate %4, %6 in 1 : vector<8x128xbf16>, vector<8x128xbf16> -> vector<8x256xbf16>
    %c0_5 = arith.constant 0 : index
    %c0_6 = arith.constant 0 : index
    %8 = vector.load %arg4[%c0_5, %c0_6] : memref<256x256xbf16, #tpu.memory_space<vmem>>, vector<256x256xbf16>
    %cst_7 = arith.constant dense<0.000000e+00> : vector<8x256xf32>
    %9 = tpu.matmul %7, %8, %cst_7 {dimension_numbers = #tpu.dot_dimension_numbers<[1], [0], [0], [1], [0, 0, 1, 1], [], []>} : vector<8x256xbf16>, vector<256x256xbf16>, vector<8x256xf32> -> vector<8x256xf32>
    %c0_8 = arith.constant 0 : index
    %c0_9 = arith.constant 0 : index
    %10 = vector.load %arg5[%c0_8, %c0_9] : memref<1x256xf32, #tpu.memory_space<vmem>>, vector<1x256xf32>
    %11 = vector.broadcast %10 : vector<1x256xf32> to vector<8x256xf32>
    %12 = arith.addf %9, %11 : vector<8x256xf32>
    %13 = vector.extract_strided_slice %12 {offsets = [0, 0], sizes = [8, 128], strides = [1, 1]} : vector<8x256xf32> to vector<8x128xf32>
    %14 = vector.extract_strided_slice %12 {offsets = [0, 128], sizes = [8, 128], strides = [1, 1]} : vector<8x256xf32> to vector<8x128xf32>
    %15 = arith.maximumf %13, %14 : vector<8x128xf32>
    %c0_10 = arith.constant 0 : index
    %c0_11 = arith.constant 0 : index
    %16 = vector.load %arg6[%c0_10, %c0_11] : memref<1x128xf32, #tpu.memory_space<vmem>>, vector<1x128xf32>
    %17 = vector.broadcast %16 : vector<1x128xf32> to vector<8x128xf32>
    %18 = arith.mulf %15, %17 : vector<8x128xf32>
    %cst_12 = arith.constant dense<0.000000e+00> : vector<8xf32>
    %19 = vector.multi_reduction <add>, %18, %cst_12 [1] : vector<8x128xf32> to vector<8xf32>
    %20 = vector.shape_cast %19 : vector<8xf32> to vector<8x1xf32>
    %c0_13 = arith.constant 0 : index
    %c0_14 = arith.constant 0 : index
    %21 = vector.load %arg7[%c0_13, %c0_14] : memref<1x1xf32, #tpu.memory_space<vmem>>, vector<1x1xf32>
    %22 = vector.broadcast %21 : vector<1x1xf32> to vector<8x1xf32>
    %23 = arith.addf %20, %22 : vector<8x1xf32>
    %24 = arith.negf %23 : vector<8x1xf32>
    %25 = math.exp %24 : vector<8x1xf32>
    %cst_15 = arith.constant 1.000000e+00 : f32
    %26 = vector.broadcast %cst_15 : f32 to vector<8x1xf32>
    %27 = arith.addf %26, %25 : vector<8x1xf32>
    %28 = arith.divf %26, %27 : vector<8x1xf32>
    %29 = tpu.transpose %28, [1, 0] : vector<8x1xf32> -> vector<1x8xf32>
    %c0_16 = arith.constant 0 : index
    %c0_17 = arith.constant 0 : index
    %30 = vector.load %arg8[%c0_16, %c0_17] : memref<1x8xf32, #tpu.memory_space<vmem>>, vector<1x8xf32>
    tpu.vector_store %arg8[%c0_16, %c0_17], %29 {strides = array<i32>} : memref<1x8xf32, #tpu.memory_space<vmem>>, vector<1x8xf32>,
    return
  }
  func.func @transform_0(%arg0: i32) -> (i32, i32) {
    %c0_i32 = arith.constant 0 : i32
    %c0_i32_0 = arith.constant 0 : i32
    return %arg0, %c0_i32 : i32, i32
  }
  func.func @transform_1(%arg0: i32) -> (i32, i32) {
    %c0_i32 = arith.constant 0 : i32
    %c0_i32_0 = arith.constant 0 : i32
    return %arg0, %c0_i32 : i32, i32
  }
  func.func @transform_2(%arg0: i32) -> (i32, i32) {
    %c0_i32 = arith.constant 0 : i32
    %c0_i32_0 = arith.constant 0 : i32
    %c0_i32_1 = arith.constant 0 : i32
    return %c0_i32, %c0_i32_0 : i32, i32
  }
  func.func @transform_3(%arg0: i32) -> (i32, i32) {
    %c0_i32 = arith.constant 0 : i32
    %c0_i32_0 = arith.constant 0 : i32
    %c0_i32_1 = arith.constant 0 : i32
    return %c0_i32, %c0_i32_0 : i32, i32
  }
  func.func @transform_4(%arg0: i32) -> (i32, i32) {
    %c0_i32 = arith.constant 0 : i32
    %c0_i32_0 = arith.constant 0 : i32
    %c0_i32_1 = arith.constant 0 : i32
    return %c0_i32, %c0_i32_0 : i32, i32
  }
  func.func @transform_5(%arg0: i32) -> (i32, i32) {
    %c0_i32 = arith.constant 0 : i32
    %c0_i32_0 = arith.constant 0 : i32
    %c0_i32_1 = arith.constant 0 : i32
    return %c0_i32, %c0_i32_0 : i32, i32
  }
  func.func @transform_6(%arg0: i32) -> (i32, i32) {
    %c0_i32 = arith.constant 0 : i32
    %c0_i32_0 = arith.constant 0 : i32
    %c0_i32_1 = arith.constant 0 : i32
    return %c0_i32, %c0_i32_0 : i32, i32
  }
  func.func @transform_7(%arg0: i32) -> (i32, i32) {
    %c0_i32 = arith.constant 0 : i32
    %c0_i32_0 = arith.constant 0 : i32
    return %arg0, %c0_i32 : i32, i32
  }
}

</mosaic_0001>

<llo_original>
// kernel: tpu_custom_call.1
$region0: #{tpu_custom_call.1}
  #allocation0 [shape = 'u32[]', space=smem, size = 0x4, offset = 0x4, fixed_abs, tag = 'smem constant byte address 0x4 - core index']
  #allocation1 [shape = 'u32[72,128]{1,0:T(1,128)}', space=vmem, size = 0x9000, scoped, tag = 'internal scratch']
  #allocation2 [shape = 'f32[1,1]{1,0:T(1,128)S(1)}', space=vmem, size = 0x200, scoped, tag = 'scoped memory for tpu_custom_call.1']
  %s0 = inlined_call_operand.hbm [shape: f32[8,128], index: 0, kind: input, shape index: {}]
  %s1 = inlined_call_operand.hbm [shape: f32[8,128], index: 1, kind: input, shape index: {}]
  %s2 = inlined_call_operand.hbm [shape: bf16[128,128], index: 2, kind: input, shape index: {}]
  %s3 = inlined_call_operand.hbm [shape: bf16[256,256], index: 3, kind: input, shape index: {}]
  %s4 = inlined_call_operand.vmem [shape: f32[1,256], index: 4, kind: input, shape index: {}]
  %s5 = inlined_call_operand.vmem [shape: f32[1,128], index: 5, kind: input, shape index: {}]
  %s6 = inlined_call_operand.<no memory space> [shape: f32[1,1], index: 6, kind: input, shape index: {}]
  %s7 = inlined_call_operand.hbm [shape: f32[1,8], index: 7, kind: output, shape index: {}]
  %s8 = sld [smem:[#allocation0]]
  $region54: #{tpu_custom_call.1} parent=0
    _
  %s10 = ssub.s32 1, %s8
  %s11 = scalar_select 0, %s10, %s8
  %v12 = vstv %s6
  %13 = vst [vmem:[#allocation2] sm:$0x1] %v12
  $region1: #{tpu_custom_call.1} parent=0
    #allocation3 [shape = 'u8[4096]{0}', space=vmem, size = 0x1000, scoped, tag = 'input window, operand 0, single buffered']
    #allocation4 [shape = 's32[1]{0}', space=sflag, size = 0x4, scoped, tag = 'scoped memory for tpu_custom_call.1']
    #allocation5 [shape = 's32[1]{0}', space=sflag, size = 0x4, scoped, tag = 'scoped memory for tpu_custom_call.1']
    #allocation6 [shape = 'u8[4096]{0}', space=vmem, size = 0x1000, scoped, tag = 'input window, operand 1, single buffered']
    #allocation7 [shape = 's32[1]{0}', space=sflag, size = 0x4, scoped, tag = 'scoped memory for tpu_custom_call.1']
    #allocation8 [shape = 'u8[32768]{0}', space=vmem, size = 0x8000, scoped, tag = 'input window, operand 2, single buffered']
    #allocation9 [shape = 'u8[131072]{0}', space=vmem, size = 0x20000, scoped, tag = 'input window, operand 3, single buffered']
    #allocation10 [shape = 's32[1]{0}', space=sflag, size = 0x4, scoped, tag = 'scoped memory for tpu_custom_call.1']
    #allocation11 [shape = 'u8[512]{0}', space=vmem, size = 0x400, scoped, tag = 'output window, operand 0, single buffered']
    %14 = vsyncpa [#allocation4], 0
    %15 = vsyncpa [#allocation7], 0
    %16 = vsyncpa [#allocation10], 0
    %17 = vsyncpa [#allocation5], 0
    // Predicated region
    $region2: #{tpu_custom_call.1} parent=1 // pred_check
      _
    $region3: #{tpu_custom_call.1} parent=1 // pred_check_branch
      %19 = sbr.rel (0) target = $region5
    $region4: #{tpu_custom_call.1} parent=1 // pred_region
      %21 = vsyncadd [#allocation4], 0
      %s23 = sshll.u32 %s0, 4
      %s24 = int_to_ptr.hbm [resolvable:$true] %s23
      %s25 = sshll.u32 [#allocation3], 4
      %s26 = int_to_ptr.vmem [resolvable:$true] %s25
      %28 = dma.hbm_to_vmem [thread:$0]  %s24, 128, %s26, [#allocation4]
    $region5: #{tpu_custom_call.1} parent=1 // pred_fallthru
      _
    // Predicated region
    $region6: #{tpu_custom_call.1} parent=1 // pred_check
      _
    $region7: #{tpu_custom_call.1} parent=1 // pred_check_branch
      %30 = sbr.rel (0) target = $region9
    $region8: #{tpu_custom_call.1} parent=1 // pred_region
      %32 = vsyncadd [#allocation7], 0
      %s34 = sshll.u32 %s1, 4
      %s35 = int_to_ptr.hbm [resolvable:$true] %s34
      %s36 = sshll.u32 [#allocation6], 4
      %s37 = int_to_ptr.vmem [resolvable:$true] %s36
      %39 = dma.hbm_to_vmem [thread:$0]  %s35, 128, %s37, [#allocation7]
    $region9: #{tpu_custom_call.1} parent=1 // pred_fallthru
      _
    // Predicated region
    $region10: #{tpu_custom_call.1} parent=1 // pred_check
      _
    $region11: #{tpu_custom_call.1} parent=1 // pred_check_branch
      %41 = sbr.rel (0) target = $region13
    $region12: #{tpu_custom_call.1} parent=1 // pred_region
      %43 = vsyncadd [#allocation7], 0
      %s44 = sshll.u32 %s2, 4
      %s45 = int_to_ptr.hbm [resolvable:$true] %s44
      %s46 = sshll.u32 [#allocation8], 4
      %s47 = int_to_ptr.vmem [resolvable:$true] %s46
      %52 = dma.hbm_to_vmem [thread:$0]  %s45, 1024, %s47, [#allocation7], 64, 64, 4
    $region13: #{tpu_custom_call.1} parent=1 // pred_fallthru
      _
    // Predicated region
    $region14: #{tpu_custom_call.1} parent=1 // pred_check
      _
    $region15: #{tpu_custom_call.1} parent=1 // pred_check_branch
      %54 = sbr.rel (0) target = $region17
    $region16: #{tpu_custom_call.1} parent=1 // pred_region
      %56 = vsyncadd [#allocation10], 0
      %s57 = sshll.u32 %s3, 4
      %s58 = int_to_ptr.hbm [resolvable:$true] %s57
      %s59 = sshll.u32 [#allocation9], 4
      %s60 = int_to_ptr.vmem [resolvable:$true] %s59
      %65 = dma.hbm_to_vmem [thread:$0]  %s58, 4096, %s60, [#allocation10], 128, 128, 8
    $region17: #{tpu_custom_call.1} parent=1 // pred_fallthru
      _
    // Predicated region
    $region18: #{tpu_custom_call.1} parent=1 // pred_check
      _
    $region19: #{tpu_custom_call.1} parent=1 // pred_check_branch
      %67 = sbr.rel (0) target = $region21
    $region20: #{tpu_custom_call.1} parent=1 // pred_region
      _
    $region21: #{tpu_custom_call.1} parent=1 // pred_fallthru
      _
    // Predicated region
    $region22: #{tpu_custom_call.1} parent=1 // pred_check
      _
    $region23: #{tpu_custom_call.1} parent=1 // pred_check_branch
      %69 = sbr.rel (0) target = $region25
    $region24: #{tpu_custom_call.1} parent=1 // pred_region
      _
    $region25: #{tpu_custom_call.1} parent=1 // pred_fallthru
      _
    // Predicated region
    $region26: #{tpu_custom_call.1} parent=1 // pred_check
      _
    $region27: #{tpu_custom_call.1} parent=1 // pred_check_branch
      %71 = sbr.rel (0) target = $region29
    $region28: #{tpu_custom_call.1} parent=1 // pred_region
      _
    $region29: #{tpu_custom_call.1} parent=1 // pred_fallthru
      _
    // Predicated region
    $region30: #{tpu_custom_call.1} parent=1 // pred_check
      _
    $region31: #{tpu_custom_call.1} parent=1 // pred_check_branch
      %73 = sbr.rel (0) target = $region33
    $region32: #{tpu_custom_call.1} parent=1 // pred_region
      %75 = dma.done [#allocation4], 128
    $region33: #{tpu_custom_call.1} parent=1 // pred_fallthru
      _
    // Predicated region
    $region34: #{tpu_custom_call.1} parent=1 // pred_check
      _
    $region35: #{tpu_custom_call.1} parent=1 // pred_check_branch
      %77 = sbr.rel (0) target = $region37
    $region36: #{tpu_custom_call.1} parent=1 // pred_region
      %79 = dma.done [#allocation7], 128
    $region37: #{tpu_custom_call.1} parent=1 // pred_fallthru
      _
    // Predicated region
    $region38: #{tpu_custom_call.1} parent=1 // pred_check
      _
    $region39: #{tpu_custom_call.1} parent=1 // pred_check_branch
      %81 = sbr.rel (0) target = $region41
    $region40: #{tpu_custom_call.1} parent=1 // pred_region
      %83 = dma.done [#allocation7], 1024
    $region41: #{tpu_custom_call.1} parent=1 // pred_fallthru
      _
    // Predicated region
    $region42: #{tpu_custom_call.1} parent=1 // pred_check
      _
    $region43: #{tpu_custom_call.1} parent=1 // pred_check_branch
      %85 = sbr.rel (0) target = $region45
    $region44: #{tpu_custom_call.1} parent=1 // pred_region
      %87 = dma.done [#allocation10], 4096
    $region45: #{tpu_custom_call.1} parent=1 // pred_fallthru
      _
    %v88 = vld [vmem:[#allocation3] sm:$0xff]
    %v89 = vpack.c.bf16 %v88, %v88
    %v90 = vld [vmem:[#allocation8] sm:$0xf]
    %v91 = vld [vmem:[#allocation8 + $0x4] sm:$0xf]
    %v92 = vld [vmem:[#allocation8 + $0x8] sm:$0xf]
    %v93 = vld [vmem:[#allocation8 + $0xc] sm:$0xf]
    %v94 = vld [vmem:[#allocation8 + $0x10] sm:$0xf]
    %v95 = vld [vmem:[#allocation8 + $0x14] sm:$0xf]
    %v96 = vld [vmem:[#allocation8 + $0x18] sm:$0xf]
    %v97 = vld [vmem:[#allocation8 + $0x1c] sm:$0xf]
    %v98 = vld [vmem:[#allocation8 + $0x20] sm:$0xf]
    %v99 = vld [vmem:[#allocation8 + $0x24] sm:$0xf]
    %v100 = vld [vmem:[#allocation8 + $0x28] sm:$0xf]
    %v101 = vld [vmem:[#allocation8 + $0x2c] sm:$0xf]
    %v102 = vld [vmem:[#allocation8 + $0x30] sm:$0xf]
    %v103 = vld [vmem:[#allocation8 + $0x34] sm:$0xf]
    %v104 = vld [vmem:[#allocation8 + $0x38] sm:$0xf]
    %v105 = vld [vmem:[#allocation8 + $0x3c] sm:$0xf]
    %v122 = vunpack.c.l.b16 %v90
    %v123 = vunpack.c.l.b16 %v91
    %v124 = vunpack.c.l.b16 %v92
    %v125 = vunpack.c.l.b16 %v93
    %v126 = vunpack.c.l.b16 %v94
    %v127 = vunpack.c.l.b16 %v95
    %v128 = vunpack.c.l.b16 %v96
    %v129 = vunpack.c.l.b16 %v97
    %v130 = vunpack.c.l.b16 %v98
    %v131 = vunpack.c.l.b16 %v99
    %v132 = vunpack.c.l.b16 %v100
    %v133 = vunpack.c.l.b16 %v101
    %v134 = vunpack.c.l.b16 %v102
    %v135 = vunpack.c.l.b16 %v103
    %v136 = vunpack.c.l.b16 %v104
    %v137 = vunpack.c.l.b16 %v105
    %v138 = vpack.c.b16 %v123, %v122
    %v139 = vpack.c.b16 %v125, %v124
    %v140 = vpack.c.b16 %v127, %v126
    %v141 = vpack.c.b16 %v129, %v128
    %v142 = vpack.c.b16 %v131, %v130
    %v143 = vpack.c.b16 %v133, %v132
    %v144 = vpack.c.b16 %v135, %v134
    %v145 = vpack.c.b16 %v137, %v136
    %154 = vmatpush.bf16.msra.mxu0 %v145
    %155 = vmatpush.bf16.msra.mxu0 %v144
    %156 = vmatpush.bf16.msra.mxu0 %v143
    %157 = vmatpush.bf16.msra.mxu0 %v142
    %158 = vmatpush.bf16.msra.mxu0 %v141
    %159 = vmatpush.bf16.msra.mxu0 %v140
    %160 = vmatpush.bf16.msra.mxu0 %v139
    %161 = vmatpush.bf16.msra.mxu0 %v138
    %162 = vmatmul.bf16.gmra.mxu0 %v89
    %v163 = vpop.f32.mrf.mxu0
    %v164 = vadd.f32 0.0, %v163
    %v165 = vpop.f32.mrf.mxu0
    %166 = vdwg.mxu0
    %v167 = vpack.c.bf16 %v164, %v164
    %v168 = vld [vmem:[#allocation6] sm:$0xff]
    %v169 = vpack.c.bf16 %v168, %v168
    %v170 = vld [vmem:[#allocation9] sm:$0xff]
    %v171 = vld [vmem:[#allocation9 + $0x8] sm:$0xff]
    %v172 = vld [vmem:[#allocation9 + $0x10] sm:$0xff]
    %v173 = vld [vmem:[#allocation9 + $0x18] sm:$0xff]
    %v174 = vld [vmem:[#allocation9 + $0x20] sm:$0xff]
    %v175 = vld [vmem:[#allocation9 + $0x28] sm:$0xff]
    %v176 = vld [vmem:[#allocation9 + $0x30] sm:$0xff]
    %v177 = vld [vmem:[#allocation9 + $0x38] sm:$0xff]
    %v178 = vld [vmem:[#allocation9 + $0x40] sm:$0xff]
    %v179 = vld [vmem:[#allocation9 + $0x48] sm:$0xff]
    %v180 = vld [vmem:[#allocation9 + $0x50] sm:$0xff]
    %v181 = vld [vmem:[#allocation9 + $0x58] sm:$0xff]
    %v182 = vld [vmem:[#allocation9 + $0x60] sm:$0xff]
    %v183 = vld [vmem:[#allocation9 + $0x68] sm:$0xff]
    %v184 = vld [vmem:[#allocation9 + $0x70] sm:$0xff]
    %v185 = vld [vmem:[#allocation9 + $0x78] sm:$0xff]
    %v186 = vld [vmem:[#allocation9 + $0x80] sm:$0xff]
    %v187 = vld [vmem:[#allocation9 + $0x88] sm:$0xff]
    %v188 = vld [vmem:[#allocation9 + $0x90] sm:$0xff]
    %v189 = vld [vmem:[#allocation9 + $0x98] sm:$0xff]
    %v190 = vld [vmem:[#allocation9 + $0xa0] sm:$0xff]
    %v191 = vld [vmem:[#allocation9 + $0xa8] sm:$0xff]
    %v192 = vld [vmem:[#allocation9 + $0xb0] sm:$0xff]
    %v193 = vld [vmem:[#allocation9 + $0xb8] sm:$0xff]
    %v194 = vld [vmem:[#allocation9 + $0xc0] sm:$0xff]
    %v195 = vld [vmem:[#allocation9 + $0xc8] sm:$0xff]
    %v196 = vld [vmem:[#allocation9 + $0xd0] sm:$0xff]
    %v197 = vld [vmem:[#allocation9 + $0xd8] sm:$0xff]
    %v198 = vld [vmem:[#allocation9 + $0xe0] sm:$0xff]
    %v199 = vld [vmem:[#allocation9 + $0xe8] sm:$0xff]
    %v200 = vld [vmem:[#allocation9 + $0xf0] sm:$0xff]
    %v201 = vld [vmem:[#allocation9 + $0xf8] sm:$0xff]
    %v202 = vld [vmem:[%s4] sm:$0x3]
    %v204 = vperm.slane %v202, 0
    %v205 = vperm.slane %v202, 1
    %v240 = vunpack.c.l.b16 %v170
    %v241 = vunpack.c.h.b16 %v170
    %v242 = vunpack.c.l.b16 %v171
    %v243 = vunpack.c.h.b16 %v171
    %v244 = vunpack.c.l.b16 %v172
    %v245 = vunpack.c.h.b16 %v172
    %v246 = vunpack.c.l.b16 %v173
    %v247 = vunpack.c.h.b16 %v173
    %v248 = vunpack.c.l.b16 %v174
    %v249 = vunpack.c.h.b16 %v174
    %v250 = vunpack.c.l.b16 %v175
    %v251 = vunpack.c.h.b16 %v175
    %v252 = vunpack.c.l.b16 %v176
    %v253 = vunpack.c.h.b16 %v176
    %v254 = vunpack.c.l.b16 %v177
    %v255 = vunpack.c.h.b16 %v177
    %v256 = vunpack.c.l.b16 %v178
    %v257 = vunpack.c.h.b16 %v178
    %v258 = vunpack.c.l.b16 %v179
    %v259 = vunpack.c.h.b16 %v179
    %v260 = vunpack.c.l.b16 %v180
    %v261 = vunpack.c.h.b16 %v180
    %v262 = vunpack.c.l.b16 %v181
    %v263 = vunpack.c.h.b16 %v181
    %v264 = vunpack.c.l.b16 %v182
    %v265 = vunpack.c.h.b16 %v182
    %v266 = vunpack.c.l.b16 %v183
    %v267 = vunpack.c.h.b16 %v183
    %v268 = vunpack.c.l.b16 %v184
    %v269 = vunpack.c.h.b16 %v184
    %v270 = vunpack.c.l.b16 %v185
    %v271 = vunpack.c.h.b16 %v185
    %v272 = vunpack.c.l.b16 %v186
    %v273 = vunpack.c.h.b16 %v186
    %v274 = vunpack.c.l.b16 %v187
    %v275 = vunpack.c.h.b16 %v187
    %v276 = vunpack.c.l.b16 %v188
    %v277 = vunpack.c.h.b16 %v188
    %v278 = vunpack.c.l.b16 %v189
    %v279 = vunpack.c.h.b16 %v189
    %v280 = vunpack.c.l.b16 %v190
    %v281 = vunpack.c.h.b16 %v190
    %v282 = vunpack.c.l.b16 %v191
    %v283 = vunpack.c.h.b16 %v191
    %v284 = vunpack.c.l.b16 %v192
    %v285 = vunpack.c.h.b16 %v192
    %v286 = vunpack.c.l.b16 %v193
    %v287 = vunpack.c.h.b16 %v193
    %v288 = vunpack.c.l.b16 %v194
    %v289 = vunpack.c.h.b16 %v194
    %v290 = vunpack.c.l.b16 %v195
    %v291 = vunpack.c.h.b16 %v195
    %v292 = vunpack.c.l.b16 %v196
    %v293 = vunpack.c.h.b16 %v196
    %v294 = vunpack.c.l.b16 %v197
    %v295 = vunpack.c.h.b16 %v197
    %v296 = vunpack.c.l.b16 %v198
    %v297 = vunpack.c.h.b16 %v198
    %v298 = vunpack.c.l.b16 %v199
    %v299 = vunpack.c.h.b16 %v199
    %v300 = vunpack.c.l.b16 %v200
    %v301 = vunpack.c.h.b16 %v200
    %v302 = vunpack.c.l.b16 %v201
    %v303 = vunpack.c.h.b16 %v201
    %v304 = vpack.c.b16 %v242, %v240
    %v305 = vpack.c.b16 %v243, %v241
    %v306 = vpack.c.b16 %v246, %v244
    %v307 = vpack.c.b16 %v247, %v245
    %v308 = vpack.c.b16 %v250, %v248
    %v309 = vpack.c.b16 %v251, %v249
    %v310 = vpack.c.b16 %v254, %v252
    %v311 = vpack.c.b16 %v255, %v253
    %v312 = vpack.c.b16 %v258, %v256
    %v313 = vpack.c.b16 %v259, %v257
    %v314 = vpack.c.b16 %v262, %v260
    %v315 = vpack.c.b16 %v263, %v261
    %v316 = vpack.c.b16 %v266, %v264
    %v317 = vpack.c.b16 %v267, %v265
    %v318 = vpack.c.b16 %v270, %v268
    %v319 = vpack.c.b16 %v271, %v269
    %v320 = vpack.c.b16 %v274, %v272
    %v321 = vpack.c.b16 %v275, %v273
    %v322 = vpack.c.b16 %v278, %v276
    %v323 = vpack.c.b16 %v279, %v277
    %v324 = vpack.c.b16 %v282, %v280
    %v325 = vpack.c.b16 %v283, %v281
    %v326 = vpack.c.b16 %v286, %v284
    %v327 = vpack.c.b16 %v287, %v285
    %v328 = vpack.c.b16 %v290, %v288
    %v329 = vpack.c.b16 %v291, %v289
    %v330 = vpack.c.b16 %v294, %v292
    %v331 = vpack.c.b16 %v295, %v293
    %v332 = vpack.c.b16 %v298, %v296
    %v333 = vpack.c.b16 %v299, %v297
    %v334 = vpack.c.b16 %v302, %v300
    %v335 = vpack.c.b16 %v303, %v301
    %368 = vmatpush.bf16.msra.mxu0 %v318
    %369 = vmatpush.bf16.msra.mxu0 %v316
    %370 = vmatpush.bf16.msra.mxu0 %v314
    %371 = vmatpush.bf16.msra.mxu0 %v312
    %372 = vmatpush.bf16.msra.mxu0 %v310
    %373 = vmatpush.bf16.msra.mxu0 %v308
    %374 = vmatpush.bf16.msra.mxu0 %v306
    %375 = vmatpush.bf16.msra.mxu0 %v304
    %376 = vmatmul.bf16.gmra.mxu0 %v167
    %v377 = vpop.f32.mrf.mxu0
    %v378 = vadd.f32 %v204, %v377
    %v379 = vpop.f32.mrf.mxu0
    %380 = vdwg.mxu0
    %381 = vmatpush.bf16.msra.mxu0 %v334
    %382 = vmatpush.bf16.msra.mxu0 %v332
    %383 = vmatpush.bf16.msra.mxu0 %v330
    %384 = vmatpush.bf16.msra.mxu0 %v328
    %385 = vmatpush.bf16.msra.mxu0 %v326
    %386 = vmatpush.bf16.msra.mxu0 %v324
    %387 = vmatpush.bf16.msra.mxu0 %v322
    %388 = vmatpush.bf16.msra.mxu0 %v320
    %389 = vmatmul.bf16.gmra.mxu0 %v169
    %v390 = vpop.f32.mrf.mxu0
    %v391 = vadd.f32 %v378, %v390
    %v392 = vpop.f32.mrf.mxu0
    %393 = vdwg.mxu0
    %394 = vmatpush.bf16.msra.mxu0 %v319
    %395 = vmatpush.bf16.msra.mxu0 %v317
    %396 = vmatpush.bf16.msra.mxu0 %v315
    %397 = vmatpush.bf16.msra.mxu0 %v313
    %398 = vmatpush.bf16.msra.mxu0 %v311
    %399 = vmatpush.bf16.msra.mxu0 %v309
    %400 = vmatpush.bf16.msra.mxu0 %v307
    %401 = vmatpush.bf16.msra.mxu0 %v305
    %402 = vmatmul.bf16.gmra.mxu0 %v167
    %v403 = vpop.f32.mrf.mxu0
    %v404 = vadd.f32 %v205, %v403
    %v405 = vpop.f32.mrf.mxu0
    %406 = vdwg.mxu0
    %407 = vmatpush.bf16.msra.mxu0 %v335
    %408 = vmatpush.bf16.msra.mxu0 %v333
    %409 = vmatpush.bf16.msra.mxu0 %v331
    %410 = vmatpush.bf16.msra.mxu0 %v329
    %411 = vmatpush.bf16.msra.mxu0 %v327
    %412 = vmatpush.bf16.msra.mxu0 %v325
    %413 = vmatpush.bf16.msra.mxu0 %v323
    %414 = vmatpush.bf16.msra.mxu0 %v321
    %415 = vmatmul.bf16.gmra.mxu0 %v169
    %v416 = vpop.f32.mrf.mxu0
    %v417 = vadd.f32 %v404, %v416
    %v418 = vpop.f32.mrf.mxu0
    %419 = vdwg.mxu0
    %v420 = vmax.f32 %v391, %v417
    %v421 = vld [vmem:[%s5] sm:$0x1]
    %v423 = vperm.slane %v421, 0
    %v425 = vmul.f32 %v420, %v423
    %426 = vadd.xlane.f32.xlu0 %v425
    %v427 = vpop.xlane.xlu0 %426
    %v428 = vld [vmem:[#allocation2] sm:$0x1]
    %v430 = vperm.slane %v428, 0
    %v432 = vadd.f32 %v427, %v430
    %v433 = vxor.u32 %v432, 2147483648
    %v434 = vmul.f32 %v433, 1.442695
    %v435 = vpow.pop %v434
    %v436 = vadd.f32 %v435, 1.0
    %v437 = vrcp.pop %v436
    %v438 = vmul.f32 %v436, %v437
    %v439 = vsub.f32 1.0, %v438
    %v440 = vmul.f32 %v437, %v439
    %v441 = vadd.f32 %v437, %v440
    %vm442 = vweird.f32 %v436
    %vm443 = vweird.f32 %v437
    %vm444 = vmor %vm442, %vm443
    %v445 = vsel %vm444, %v437, %v441
    %v446 = vand.u32 2147483647, %v436
    %vm447 = vcmp.eq.f32.partialorder %v446, 8.507059e+37
    %v448 = vand.u32 %v436, 2147483648
    %v449 = vor.u32 1.1754944e-38, %v448
    %v450 = vsel %vm447, %v449, %v445
    %v451 = vmul.f32 1.0, %v450
    %452 = vxpose.xlu0.b32.start [1/16] %v451, 128
    %453 = vxpose.xlu0.b32.cont [2/16] 0.0, 128
    %454 = vxpose.xlu0.b32.cont [3/16] 0.0, 128
    %455 = vxpose.xlu0.b32.cont [4/16] 0.0, 128
    %456 = vxpose.xlu0.b32.cont [5/16] 0.0, 128
    %457 = vxpose.xlu0.b32.cont [6/16] 0.0, 128
    %458 = vxpose.xlu0.b32.cont [7/16] 0.0, 128
    %459 = vxpose.xlu0.b32.cont [8/16] 0.0, 128
    %460 = vxpose.xlu0.b32.cont [9/16] 0.0, 128
    %461 = vxpose.xlu0.b32.cont [10/16] 0.0, 128
    %462 = vxpose.xlu0.b32.cont [11/16] 0.0, 128
    %463 = vxpose.xlu0.b32.cont [12/16] 0.0, 128
    %464 = vxpose.xlu0.b32.cont [13/16] 0.0, 128
    %465 = vxpose.xlu0.b32.cont [14/16] 0.0, 128
    %466 = vxpose.xlu0.b32.cont [15/16] 0.0, 128
    %467 = vxpose.xlu0.b32.end [16/16] 0.0, 128
    %v468 = vpop.trf.xlu0
    %v469 = vpop.trf.xlu0
    %v470 = vpop.trf.xlu0
    %v471 = vpop.trf.xlu0
    %v472 = vpop.trf.xlu0
    %v473 = vpop.trf.xlu0
    %v474 = vpop.trf.xlu0
    %v475 = vpop.trf.xlu0
    %v476 = vpop.trf.xlu0
    %v477 = vpop.trf.xlu0
    %v478 = vpop.trf.xlu0
    %v479 = vpop.trf.xlu0
    %v480 = vpop.trf.xlu0
    %v481 = vpop.trf.xlu0
    %v482 = vpop.trf.xlu0
    %v483 = vpop.trf.xlu0
    %vm484 = vcmask 57344
    %485 = vst.msk [vmem:[#allocation11] sm:$0x1] %vm484, %v468
    // Predicated region
    $region46: #{tpu_custom_call.1} parent=1 // pred_check
      _
    $region47: #{tpu_custom_call.1} parent=1 // pred_check_branch
      %487 = sbr.rel (0) target = $region49
    $region48: #{tpu_custom_call.1} parent=1 // pred_region
      %489 = vsyncadd [#allocation5], 0
      %s491 = sshll.u32 [#allocation11], 4
      %s492 = int_to_ptr.vmem [resolvable:$true] %s491
      %s493 = sshll.u32 %s7, 4
      %s494 = int_to_ptr.hbm [resolvable:$true] %s493
      %496 = dma.vmem_to_hbm [thread:$0]  %s492, 16, %s494, [#allocation5]
    $region49: #{tpu_custom_call.1} parent=1 // pred_fallthru
      _
    // Predicated region
    $region50: #{tpu_custom_call.1} parent=1 // pred_check
      _
    $region51: #{tpu_custom_call.1} parent=1 // pred_check_branch
      %498 = sbr.rel (0) target = $region53
    $region52: #{tpu_custom_call.1} parent=1 // pred_region
      %500 = dma.done [#allocation5], 16
    $region53: #{tpu_custom_call.1} parent=1 // pred_fallthru
      _
    %501 = vsyncpa [#allocation4], 1
    %502 = vsyncpa [#allocation7], 1
    %503 = vsyncpa [#allocation10], 1
    %504 = vsyncpa [#allocation5], 1

</llo_original>
